<compile_context>
chip_gen: v5e
topology: v5e:2x2
jax: 0.10.0
libtpu: 0.0.40
codegen_flags: <defaults>
</compile_context>

<pallas_src>
import jax
import jax.numpy as jnp
from jax.experimental import pallas as pl
from jax.experimental.pallas import tpu as pltpu


def _dual_mask_kernel(feat_ref, mask_ref, p_ref, out_ref):
    # feat: (1, TC, THW); mask: (1, TCm, THW) with TCm in {1, TC};
    # p:    (TC, 3) packed per-channel params [w_diff, w_b, b_sum].
    feat = feat_ref[...]
    mask = mask_ref[...]
    p = p_ref[...]
    w_diff = p[:, 0:1][None]   # (1, TC, 1) -> broadcast over the lane (HW) axis
    w_b = p[:, 1:2][None]
    b_sum = p[:, 2:3][None]
    # out = wa*feat*mask + ba + wb*feat*(1-mask) + bb
    #     = feat * (wb + (wa - wb)*mask) + (ba + bb)
    out_ref[...] = (feat * (w_b + w_diff * mask) + b_sum).astype(out_ref.dtype)


def _pick_tile(dim, align, cap):
    """Largest t <= cap with t % align == 0 and dim % t == 0; else the full dim."""
    t = min(cap, dim)
    t -= t % align
    while t >= align:
        if dim % t == 0:
            return t
        t -= align
    return dim  # full-dim block is always a legal block shape


def dual_mask_injection(feat, mask, weight_a, weight_b, bias_a, bias_b):
    """feat: (N, C, H, W); mask: 4-D, broadcastable to feat with channel dim 1 or C."""
    N, C, H, W = feat.shape
    HW = H * W
    dtype = feat.dtype

    # Broadcast only batch/spatial dims of the mask; keep its channel dim (1 or C)
    # so we never materialize a C-times-larger mask in HBM.
    Cm = mask.shape[1]
    assert Cm in (1, C), "mask channel dim must be 1 or C"
    mask_f = jnp.broadcast_to(mask, (N, Cm, H, W)).astype(dtype).reshape(N, Cm, HW)
    feat_f = feat.reshape(N, C, HW)

    # Pack per-channel params into one (C, 3) array: [wa - wb, wb, ba + bb].
    wa = weight_a.reshape(C).astype(dtype)
    wb = weight_b.reshape(C).astype(dtype)
    ba = bias_a.reshape(C).astype(dtype)
    bb = bias_b.reshape(C).astype(dtype)
    params = jnp.stack([wa - wb, wb, ba + bb], axis=-1)  # (C, 3)

    # Tile sizes: sublane-aligned channel tile, lane-aligned spatial tile.
    # ~1 MiB f32 max per input block -> double-buffered pipeline fits the
    # default scoped-VMEM limit on all of v5e / v6e / v7x.
    TC = _pick_tile(C, 8, 128)
    THW = _pick_tile(HW, 128, 2048)
    grid = (N, C // TC, HW // THW)

    feat_spec = pl.BlockSpec((1, TC, THW), lambda n, ci, hi: (n, ci, hi))
    if Cm == C:
        mask_spec = pl.BlockSpec((1, TC, THW), lambda n, ci, hi: (n, ci, hi))
    else:
        mask_spec = pl.BlockSpec((1, 1, THW), lambda n, ci, hi: (n, 0, hi))
    param_spec = pl.BlockSpec((TC, 3), lambda n, ci, hi: (ci, 0))

    out = pl.pallas_call(
        _dual_mask_kernel,
        out_shape=jax.ShapeDtypeStruct((N, C, HW), dtype),
        grid_spec=pltpu.PrefetchScalarGridSpec(
            num_scalar_prefetch=0,
            grid=grid,
            in_specs=[feat_spec, mask_spec, param_spec],
            out_specs=feat_spec,
        ),
        compiler_params=pltpu.CompilerParams(
            dimension_semantics=("parallel", "parallel", "parallel")),
    )(feat_f, mask_f, params)

    return out.reshape(N, C, H, W)


if __name__ == "__main__":
    N, C, H, W = 2, 4, 16, 16

    # Deterministic parameter init matching the PyTorch module's __init__.
    weight_a = jnp.ones((1, C, 1, 1), jnp.float32) * 1.1
    weight_b = jnp.ones((1, C, 1, 1), jnp.float32) * 0.9
    bias_a = jnp.zeros((1, C, 1, 1), jnp.float32) + 0.01
    bias_b = jnp.zeros((1, C, 1, 1), jnp.float32) + 0.01

    key = jax.random.PRNGKey(0)
    k1, k2 = jax.random.split(key)
    feat = jax.random.normal(k1, (N, C, H, W), jnp.float32)
    # Binary-ish mask, single channel broadcast over C (typical usage).
    mask = (jax.random.uniform(k2, (N, 1, H, W)) > 0.5).astype(jnp.float32)

    out = dual_mask_injection(feat, mask, weight_a, weight_b, bias_a, bias_b)
    out = jax.block_until_ready(out)

    # Reference check in plain JAX (fused form re-associates fp ops -> tolerance).
    feat_a = weight_a * feat * mask + bias_a
    feat_b = weight_b * feat * (1.0 - mask) + bias_b
    ref = feat_a + feat_b
    assert out.shape == (N, C, H, W)
    assert jnp.allclose(out, ref, atol=1e-5, rtol=1e-5), float(
        jnp.max(jnp.abs(out - ref)))

    print("KERNEL_OK")
</pallas_src>

<mosaic_0001>
module attributes {stable_mosaic.version = 11 : i64} {
  func.func @_dual_mask_kernel(%arg0: i32, %arg1: i32, %arg2: i32, %arg3: memref<1x4x256xf32, #tpu.memory_space<vmem>>, %arg4: memref<1x1x256xf32, #tpu.memory_space<vmem>>, %arg5: memref<4x3xf32, #tpu.memory_space<vmem>>, %arg6: memref<1x4x256xf32, #tpu.memory_space<vmem>>) attributes {dimension_semantics = [#tpu.dimension_semantics<parallel>, #tpu.dimension_semantics<parallel>, #tpu.dimension_semantics<parallel>], iteration_bounds = array<i64: 2, 1, 1>, scalar_prefetch = 0 : i64, scratch_operands = 0 : i64, tpu.core_type = #tpu.core_type<tc>, window_params = [{transform_indices = @transform_0, window_bounds = array<i64: 1, 4, 256>}, {transform_indices = @transform_1, window_bounds = array<i64: 1, 1, 256>}, {transform_indices = @transform_2, window_bounds = array<i64: 4, 3>}, {transform_indices = @transform_3, window_bounds = array<i64: 1, 4, 256>}]} {
    %c0 = arith.constant 0 : index
    %c0_0 = arith.constant 0 : index
    %c0_1 = arith.constant 0 : index
    %0 = vector.load %arg3[%c0, %c0_0, %c0_1] : memref<1x4x256xf32, #tpu.memory_space<vmem>>, vector<1x4x256xf32>
    %c0_2 = arith.constant 0 : index
    %c0_3 = arith.constant 0 : index
    %c0_4 = arith.constant 0 : index
    %1 = vector.load %arg4[%c0_2, %c0_3, %c0_4] : memref<1x1x256xf32, #tpu.memory_space<vmem>>, vector<1x1x256xf32>
    %c0_5 = arith.constant 0 : index
    %c0_6 = arith.constant 0 : index
    %2 = vector.load %arg5[%c0_5, %c0_6] : memref<4x3xf32, #tpu.memory_space<vmem>>, vector<4x3xf32>
    %3 = vector.extract_strided_slice %2 {offsets = [0, 0], sizes = [4, 1], strides = [1, 1]} : vector<4x3xf32> to vector<4x1xf32>
    %4 = vector.shape_cast %3 : vector<4x1xf32> to vector<1x4x1xf32>
    %5 = vector.extract_strided_slice %2 {offsets = [0, 1], sizes = [4, 1], strides = [1, 1]} : vector<4x3xf32> to vector<4x1xf32>
    %6 = vector.shape_cast %5 : vector<4x1xf32> to vector<1x4x1xf32>
    %7 = vector.extract_strided_slice %2 {offsets = [0, 2], sizes = [4, 1], strides = [1, 1]} : vector<4x3xf32> to vector<4x1xf32>
    %8 = vector.shape_cast %7 : vector<4x1xf32> to vector<1x4x1xf32>
    %9 = vector.broadcast %4 : vector<1x4x1xf32> to vector<1x4x256xf32>
    %10 = vector.broadcast %1 : vector<1x1x256xf32> to vector<1x4x256xf32>
    %11 = arith.mulf %9, %10 : vector<1x4x256xf32>
    %12 = vector.broadcast %6 : vector<1x4x1xf32> to vector<1x4x256xf32>
    %13 = arith.addf %12, %11 : vector<1x4x256xf32>
    %14 = arith.mulf %0, %13 : vector<1x4x256xf32>
    %15 = vector.broadcast %8 : vector<1x4x1xf32> to vector<1x4x256xf32>
    %16 = arith.addf %14, %15 : vector<1x4x256xf32>
    %c0_7 = arith.constant 0 : index
    %c0_8 = arith.constant 0 : index
    %c0_9 = arith.constant 0 : index
    %17 = vector.load %arg6[%c0_7, %c0_8, %c0_9] : memref<1x4x256xf32, #tpu.memory_space<vmem>>, vector<1x4x256xf32>
    tpu.vector_store %arg6[%c0_7, %c0_8, %c0_9], %16 {strides = array<i32>} : memref<1x4x256xf32, #tpu.memory_space<vmem>>, vector<1x4x256xf32>,
    return
  }
  func.func @transform_0(%arg0: i32, %arg1: i32, %arg2: i32) -> (i32, i32, i32) {
    %c0_i32 = arith.constant 0 : i32
    return %arg0, %arg1, %arg2 : i32, i32, i32
  }
  func.func @transform_1(%arg0: i32, %arg1: i32, %arg2: i32) -> (i32, i32, i32) {
    %c0_i32 = arith.constant 0 : i32
    %c0_i32_0 = arith.constant 0 : i32
    return %arg0, %c0_i32, %arg2 : i32, i32, i32
  }
  func.func @transform_2(%arg0: i32, %arg1: i32, %arg2: i32) -> (i32, i32) {
    %c0_i32 = arith.constant 0 : i32
    %c0_i32_0 = arith.constant 0 : i32
    return %arg1, %c0_i32 : i32, i32
  }
  func.func @transform_3(%arg0: i32, %arg1: i32, %arg2: i32) -> (i32, i32, i32) {
    %c0_i32 = arith.constant 0 : i32
    return %arg0, %arg1, %arg2 : i32, i32, i32
  }
}

</mosaic_0001>

<llo_original>
// kernel: tpu_custom_call.1
$region0: #{tpu_custom_call.1}
  #allocation0 [shape = 'u32[]', space=smem, size = 0x4, offset = 0x4, fixed_abs, tag = 'smem constant byte address 0x4 - core index']
  #allocation1 [shape = 'u32[72,128]{1,0:T(1,128)}', space=vmem, size = 0x9000, scoped, tag = 'internal scratch']
  %s0 = inlined_call_operand.hbm [shape: f32[2,4,256], index: 0, kind: input, shape index: {}]
  %s1 = inlined_call_operand.hbm [shape: f32[2,1,256], index: 1, kind: input, shape index: {}]
  %s2 = inlined_call_operand.hbm [shape: f32[4,3], index: 2, kind: input, shape index: {}]
  %s3 = inlined_call_operand.hbm [shape: f32[2,4,256], index: 3, kind: output, shape index: {}]
  %s4 = sld [smem:[#allocation0]]
  $region57: #{tpu_custom_call.1} parent=0
    _
  %s6 = ssub.s32 1, %s4
  %s7 = scalar_select 0, %s6, %s4
  $region1: #{tpu_custom_call.1} parent=0
    #allocation2 [shape = 'u8[8192]{0}', space=vmem, size = 0x2000, scoped, tag = 'input window, operand 0']
    #allocation3 [shape = 's32[2]{0}', space=sflag, size = 0x8, scoped, tag = 'scoped memory for tpu_custom_call.1']
    #allocation4 [shape = 's32[2]{0}', space=sflag, size = 0x8, scoped, tag = 'scoped memory for tpu_custom_call.1']
    #allocation5 [shape = 'u8[2048]{0}', space=vmem, size = 0x800, scoped, tag = 'input window, operand 1']
    #allocation6 [shape = 's32[2]{0}', space=sflag, size = 0x8, scoped, tag = 'scoped memory for tpu_custom_call.1']
    #allocation7 [shape = 'u8[2048]{0}', space=vmem, size = 0x800, scoped, tag = 'input window, operand 2, single buffered']
    #allocation8 [shape = 'u8[8192]{0}', space=vmem, size = 0x2000, scoped, tag = 'output window, operand 0']
    %8 = vsyncpa [#allocation3], 0
    %s9 = scalar_lea.sflag [#allocation3], 1
    %10 = vsyncpa %s9, 0
    %11 = vsyncpa [#allocation6], 0
    %s12 = scalar_lea.sflag [#allocation6], 1
    %13 = vsyncpa %s12, 0
    %14 = vsyncpa [#allocation4], 0
    %s15 = scalar_lea.sflag [#allocation4], 1
    %16 = vsyncpa %s15, 0
    loop: start=0, step=1, limit=4
    $region2: #{tpu_custom_call.1} parent=1 // loop_pre_header
      _
    $region3: #{tpu_custom_call.1} parent=1 // loop_header
      %s18 = sphi 0, %s22
      %p19 = scmp.ge.s32.totalorder %s18, 4
      %s25 = sphi 0, %s44
      %s26 = sphi 0, %s40
      %s27 = sphi 0, %s36
      %s28 = sphi 0, %s25
      %s29 = sphi 0, %s26
      %s30 = sphi 0, %s27
      %s31 = sphi 0, %s28
      %s32 = sphi 0, %s29
      %s33 = sphi 0, %s30
      %s51 = sphi 0, %s53
      %s54 = sphi 0, %s51
      %s55 = sphi 0, %s54
      %s71 = sphi 0, %s55
      %s79 = sphi 0, %s81
      %s82 = sphi 0, %s79
      %s83 = sphi 0, %s82
      %s99 = sphi 0, %s83
      %s105 = sphi 0, %s107
      %s108 = sphi 0, %s105
      %s109 = sphi 0, %s108
      %s125 = sphi 0, %s109
      %s135 = sphi 0, %s137
      %s138 = sphi 0, %s135
      %s139 = sphi 0, %s138
      %s155 = sphi 0, %s139
    $region4: #{tpu_custom_call.1} parent=1 // loop_header_branch
      %21 = sbr.rel (%p19) target = $region8
    $region5: #{tpu_custom_call.1} parent=1 // loop_body
      %s23 = ssub.s32 %s18, 1
      %s24 = ssub.s32 %s18, 2
      %s34 = sadd.s32 1, %s27
      %p35 = scmp.ge.s32.totalorder %s34, 1
      %s36 = scalar_select %p35, 0, %s34
      %s37 = sadd.s32 1, %s26
      %s38 = scalar_select %p35, %s37, %s26
      %p39 = scmp.ge.s32.totalorder %s38, 1
      %s40 = scalar_select %p39, 0, %s38
      %s41 = sadd.s32 1, %s25
      %s42 = scalar_select %p39, %s41, %s25
      %p43 = scmp.ge.s32.totalorder %s42, 2
      %s44 = scalar_select %p43, 0, %s42
      %s45 = ssub.s32 %s25, %s44
      %s46 = ssub.s32 %s26, %s40
      %s47 = sor.u32 %s45, %s46
      %s48 = ssub.s32 %s27, %s36
      %s49 = sor.u32 %s47, %s48
      %p50 = scmp.eq.s32.totalorder %s49, 0
      %s52 = sadd.s32 %s51, 1
      %s53 = scalar_select %p50, %s51, %s52
      %p56 = pneg %p50
      %p57 = scmp.eq.s32.totalorder %s18, 1
      %p58 = por %p56, %p57
      %p59 = scmp.ne.s32.totalorder %s51, %s54
      %p60 = scmp.eq.s32.totalorder %s18, 0
      %p61 = por %p59, %p60
      %p62 = scmp.ne.s32.totalorder %s51, %s54
      %p63 = scmp.eq.s32.totalorder %s23, 1
      %p64 = por %p62, %p63
      %p65 = scmp.ne.s32.totalorder %s54, %s55
      %p66 = scmp.eq.s32.totalorder %s23, 0
      %p67 = por %p65, %p66
      %p68 = scmp.ne.s32.totalorder %s54, %s55
      %p69 = scmp.eq.s32.totalorder %s24, 1
      %p70 = por %p68, %p69
      %p72 = scmp.ne.s32.totalorder %s55, %s71
      %p73 = scmp.eq.s32.totalorder %s24, 0
      %p74 = por %p72, %p73
      %s75 = ssub.s32 %s25, %s44
      %s76 = ssub.s32 %s27, %s36
      %s77 = sor.u32 %s75, %s76
      %p78 = scmp.eq.s32.totalorder %s77, 0
      %s80 = sadd.s32 %s79, 1
      %s81 = scalar_select %p78, %s79, %s80
      %p84 = pneg %p78
      %p85 = scmp.eq.s32.totalorder %s18, 1
      %p86 = por %p84, %p85
      %p87 = scmp.ne.s32.totalorder %s79, %s82
      %p88 = scmp.eq.s32.totalorder %s18, 0
      %p89 = por %p87, %p88
      %p90 = scmp.ne.s32.totalorder %s79, %s82
      %p91 = scmp.eq.s32.totalorder %s23, 1
      %p92 = por %p90, %p91
      %p93 = scmp.ne.s32.totalorder %s82, %s83
      %p94 = scmp.eq.s32.totalorder %s23, 0
      %p95 = por %p93, %p94
      %p96 = scmp.ne.s32.totalorder %s82, %s83
      %p97 = scmp.eq.s32.totalorder %s24, 1
      %p98 = por %p96, %p97
      %p100 = scmp.ne.s32.totalorder %s83, %s99
      %p101 = scmp.eq.s32.totalorder %s24, 0
      %p102 = por %p100, %p101
      %s103 = ssub.s32 %s26, %s40
      %p104 = scmp.eq.s32.totalorder %s103, 0
      %s106 = sadd.s32 %s105, 1
      %s107 = scalar_select %p104, %s105, %s106
      %p110 = pneg %p104
      %p111 = scmp.eq.s32.totalorder %s18, 1
      %p112 = por %p110, %p111
      %p113 = scmp.ne.s32.totalorder %s105, %s108
      %p114 = scmp.eq.s32.totalorder %s18, 0
      %p115 = por %p113, %p114
      %p116 = scmp.ne.s32.totalorder %s105, %s108
      %p117 = scmp.eq.s32.totalorder %s23, 1
      %p118 = por %p116, %p117
      %p119 = scmp.ne.s32.totalorder %s108, %s109
      %p120 = scmp.eq.s32.totalorder %s23, 0
      %p121 = por %p119, %p120
      %p122 = scmp.ne.s32.totalorder %s108, %s109
      %p123 = scmp.eq.s32.totalorder %s24, 1
      %p124 = por %p122, %p123
      %p126 = scmp.ne.s32.totalorder %s109, %s125
      %p127 = scmp.eq.s32.totalorder %s24, 0
      %p128 = por %p126, %p127
      %s129 = ssub.s32 %s25, %s44
      %s130 = ssub.s32 %s26, %s40
      %s131 = sor.u32 %s129, %s130
      %s132 = ssub.s32 %s27, %s36
      %s133 = sor.u32 %s131, %s132
      %p134 = scmp.eq.s32.totalorder %s133, 0
      %s136 = sadd.s32 %s135, 1
      %s137 = scalar_select %p134, %s135, %s136
      %p140 = pneg %p134
      %p141 = scmp.eq.s32.totalorder %s18, 1
      %p142 = por %p140, %p141
      %p143 = scmp.ne.s32.totalorder %s135, %s138
      %p144 = scmp.eq.s32.totalorder %s18, 0
      %p145 = por %p143, %p144
      %p146 = scmp.ne.s32.totalorder %s135, %s138
      %p147 = scmp.eq.s32.totalorder %s23, 1
      %p148 = por %p146, %p147
      %p149 = scmp.ne.s32.totalorder %s138, %s139
      %p150 = scmp.eq.s32.totalorder %s23, 0
      %p151 = por %p149, %p150
      %p152 = scmp.ne.s32.totalorder %s138, %s139
      %p153 = scmp.eq.s32.totalorder %s24, 1
      %p154 = por %p152, %p153
      %p156 = scmp.ne.s32.totalorder %s139, %s155
      %p157 = scmp.eq.s32.totalorder %s24, 0
      %p158 = por %p156, %p157
      %p159 = scmp.le.s32.totalorder 1, %s18
      %p160 = scmp.lt.s32.totalorder %s18, 3
      %p161 = pnand %p159, %p160
      %p162 = pneg %p161
      // Predicated region
      $region9: #{tpu_custom_call.1} parent=5 // pred_check
        _
      $region10: #{tpu_custom_call.1} parent=5 // pred_check_branch
        %164 = sbr.rel (%p161) target = $region12
      $region11: #{tpu_custom_call.1} parent=5 // pred_region
        %s165 = ssub.s32 %s18, 1
        // Predicated region
        $region13: #{tpu_custom_call.1} parent=11 // pred_check
          %p166 = pneg %p121
        $region14: #{tpu_custom_call.1} parent=11 // pred_check_branch
          %168 = sbr.rel (%p166) target = $region16
        $region15: #{tpu_custom_call.1} parent=11 // pred_region
          %170 = vsyncadd [#allocation6], 0
          %s171 = smul.addr %s29, 4
          %s172 = scalar_lea.hbm %s2, %s171
          %s174 = sshll.u32 %s172, 4
          %s175 = int_to_ptr.hbm [resolvable:$true] %s174
          %s176 = sshll.u32 [#allocation7], 4
          %s177 = int_to_ptr.vmem [resolvable:$true] %s176
          %179 = dma.hbm_to_vmem [thread:$0]  %s175, 64, %s177, [#allocation6]
        $region16: #{tpu_custom_call.1} parent=11 // pred_fallthru
          _
      $region12: #{tpu_custom_call.1} parent=5 // pred_fallthru
        _
      %p180 = scmp.lt.s32.totalorder %s18, 2
      // Predicated region
      $region17: #{tpu_custom_call.1} parent=5 // pred_check
        %p181 = pneg %p180
      $region18: #{tpu_custom_call.1} parent=5 // pred_check_branch
        %183 = sbr.rel (%p181) target = $region20
      $region19: #{tpu_custom_call.1} parent=5 // pred_region
        // Predicated region
        $region21: #{tpu_custom_call.1} parent=19 // pred_check
          %p184 = pneg %p61
        $region22: #{tpu_custom_call.1} parent=19 // pred_check_branch
          %186 = sbr.rel (%p184) target = $region24
        $region23: #{tpu_custom_call.1} parent=19 // pred_region
          %s187 = sand.u32 %s51, 1
          %s188 = scalar_lea.sflag [#allocation3], %s187
          %s189 = sand.u32 %s51, 1
          %s190 = smul.addr %s189, 8
          %s191 = scalar_lea.vmem [#allocation2], %s190
          %s192 = smul.u32 2, %s27
          %194 = vsyncadd %s188, 0
          %s195 = smul.addr %s26, 2
          %s196 = sadd.s32 %s192, %s195
          %s197 = smul.addr %s25, 2
          %s198 = sadd.s32 %s196, %s197
          %s199 = smul.addr %s198, 4
          %s200 = scalar_lea.hbm %s0, %s199
          %s202 = sshll.u32 %s200, 4
          %s203 = int_to_ptr.hbm [resolvable:$true] %s202
          %s204 = sshll.u32 %s191, 4
          %s205 = int_to_ptr.vmem [resolvable:$true] %s204
          %207 = dma.hbm_to_vmem [thread:$0]  %s203, 128, %s205, %s188
        $region24: #{tpu_custom_call.1} parent=19 // pred_fallthru
          _
        // Predicated region
        $region25: #{tpu_custom_call.1} parent=19 // pred_check
          %p208 = pneg %p89
        $region26: #{tpu_custom_call.1} parent=19 // pred_check_branch
          %210 = sbr.rel (%p208) target = $region28
        $region27: #{tpu_custom_call.1} parent=19 // pred_region
          %s211 = sand.u32 %s18, 1
          %s212 = scalar_lea.sflag [#allocation6], %s211
          %s213 = sand.u32 %s79, 1
          %s214 = smul.addr %s213, 2
          %s215 = scalar_lea.vmem [#allocation5], %s214
          %s216 = smul.u32 2, %s27
          %218 = vsyncadd %s212, 0
          %s219 = smul.addr %s25, 2
          %s220 = sadd.s32 %s216, %s219
          %s221 = scalar_lea.hbm %s1, %s220
          %s223 = sshll.u32 %s221, 4
          %s224 = int_to_ptr.hbm [resolvable:$true] %s223
          %s225 = sshll.u32 %s215, 4
          %s226 = int_to_ptr.vmem [resolvable:$true] %s225
          %228 = dma.hbm_to_vmem [thread:$0]  %s224, 32, %s226, %s212
        $region28: #{tpu_custom_call.1} parent=19 // pred_fallthru
          _
      $region20: #{tpu_custom_call.1} parent=5 // pred_fallthru
        _
      %p229 = scmp.le.s32.totalorder 1, %s18
      %p230 = scmp.lt.s32.totalorder %s18, 3
      %p231 = pnand %p229, %p230
      %p232 = pneg %p231
      // Predicated region
      $region29: #{tpu_custom_call.1} parent=5 // pred_check
        _
      $region30: #{tpu_custom_call.1} parent=5 // pred_check_branch
        %234 = sbr.rel (%p231) target = $region32
      $region31: #{tpu_custom_call.1} parent=5 // pred_region
        %s235 = ssub.s32 %s18, 1
        %s236 = sand.u32 %s54, 1
        %s237 = scalar_lea.sflag [#allocation3], %s236
        %s238 = sand.u32 %s54, 1
        %s239 = smul.addr %s238, 8
        %s240 = scalar_lea.vmem [#allocation2], %s239
        // Predicated region
        $region33: #{tpu_custom_call.1} parent=31 // pred_check
          %p241 = pneg %p67
        $region34: #{tpu_custom_call.1} parent=31 // pred_check_branch
          %243 = sbr.rel (%p241) target = $region36
        $region35: #{tpu_custom_call.1} parent=31 // pred_region
          %245 = dma.done %s237, 128
        $region36: #{tpu_custom_call.1} parent=31 // pred_fallthru
          _
        %s246 = sand.u32 %s23, 1
        %s247 = scalar_lea.sflag [#allocation6], %s246
        %s248 = sand.u32 %s82, 1
        %s249 = smul.addr %s248, 2
        %s250 = scalar_lea.vmem [#allocation5], %s249
        // Predicated region
        $region37: #{tpu_custom_call.1} parent=31 // pred_check
          %p251 = pneg %p95
        $region38: #{tpu_custom_call.1} parent=31 // pred_check_branch
          %253 = sbr.rel (%p251) target = $region40
        $region39: #{tpu_custom_call.1} parent=31 // pred_region
          %255 = dma.done %s247, 32
        $region40: #{tpu_custom_call.1} parent=31 // pred_fallthru
          _
        // Predicated region
        $region41: #{tpu_custom_call.1} parent=31 // pred_check
          %p256 = pneg %p121
        $region42: #{tpu_custom_call.1} parent=31 // pred_check_branch
          %258 = sbr.rel (%p256) target = $region44
        $region43: #{tpu_custom_call.1} parent=31 // pred_region
          %260 = dma.done [#allocation6], 64
        $region44: #{tpu_custom_call.1} parent=31 // pred_fallthru
          _
        %s261 = sand.u32 %s54, 1
        %s262 = scalar_lea.sflag [#allocation3], %s261
        %s263 = sand.u32 %s54, 1
        %s264 = smul.addr %s263, 8
        %s265 = scalar_lea.vmem [#allocation2], %s264
        %p266 = pneg %p67
        %p267 = pneg %p64
        %s268 = sand.u32 %s23, 1
        %s269 = scalar_lea.sflag [#allocation6], %s268
        %s270 = sand.u32 %s82, 1
        %s271 = smul.addr %s270, 2
        %s272 = scalar_lea.vmem [#allocation5], %s271
        %p273 = pneg %p95
        %p274 = pneg %p92
        %p275 = pneg %p121
        %p276 = pneg %p118
        %p277 = pneg %p151
        %p278 = pneg %p148
        %s279 = sand.u32 %s138, 1
        %s280 = scalar_lea.sflag [#allocation4], %s279
        %s281 = sand.u32 %s138, 1
        %s282 = smul.addr %s281, 8
        %s283 = scalar_lea.vmem [#allocation8], %s282
        %s284 = smul.u32 2, %s30
        %s285 = smul.u32 2, %s30
        %s286 = smul.u32 2, %s30
        %v287 = vld [vmem:[%s240] sm:$0xff]
        %v288 = vld [vmem:[%s250] sm:$0x3]
        %v289 = vld [vmem:[#allocation7] sm:$0xf]
        %291 = vset.pattern.permute.xlu0 0
        %292 = vperm.xlu0 %291, %v289
        %v293 = vpop.permute.xlu0 %292
        %v296 = vperm.slane %v288, 0
        %v297 = vperm.slane %v288, 1
        %v300 = vmul.f32 %v293, %v296
        %v301 = vmul.f32 %v293, %v297
        %302 = vset.pattern.permute.xlu0 1
        %303 = vperm.xlu0 %302, %v289
        %v304 = vpop.permute.xlu0 %303
        %v306 = vadd.f32 %v304, %v300
        %v307 = vadd.f32 %v304, %v301
        %v310 = vrot.slane %v307, 4
        %vm311 = vcmask 1043456
        %v312 = vsel %vm311, %v306, %v310
        %v314 = vmul.f32 %v287, %v312
        %315 = vset.pattern.permute.xlu0 2
        %316 = vperm.xlu0 %315, %v289
        %v317 = vpop.permute.xlu0 %316
        %v319 = vunpack.c.l.s4 839922192
        %v320 = vunpack.c.0.s8 %v319
        %v321 = vperm.slane %v317, %v320
        %v323 = vadd.f32 %v314, %v321
        %324 = vst [vmem:[%s283] sm:$0xff] %v323
        %s325 = sand.u32 %s138, 1
        %s326 = scalar_lea.sflag [#allocation4], %s325
        %s327 = sand.u32 %s138, 1
        %s328 = smul.addr %s327, 8
        %s329 = scalar_lea.vmem [#allocation8], %s328
        // Predicated region
        $region45: #{tpu_custom_call.1} parent=31 // pred_check
          %p330 = pneg %p148
        $region46: #{tpu_custom_call.1} parent=31 // pred_check_branch
          %332 = sbr.rel (%p330) target = $region48
        $region47: #{tpu_custom_call.1} parent=31 // pred_region
          %s333 = smul.u32 2, %s30
          %335 = vsyncadd %s326, 0
          %s336 = smul.addr %s29, 2
          %s337 = sadd.s32 %s333, %s336
          %s338 = smul.addr %s28, 2
          %s339 = sadd.s32 %s337, %s338
          %s340 = smul.addr %s339, 4
          %s341 = scalar_lea.hbm %s3, %s340
          %s343 = sshll.u32 %s329, 4
          %s344 = int_to_ptr.vmem [resolvable:$true] %s343
          %s345 = sshll.u32 %s341, 4
          %s346 = int_to_ptr.hbm [resolvable:$true] %s345
          %348 = dma.vmem_to_hbm [thread:$0]  %s344, 128, %s346, %s326
        $region48: #{tpu_custom_call.1} parent=31 // pred_fallthru
          _
      $region32: #{tpu_custom_call.1} parent=5 // pred_fallthru
        _
      %p349 = scmp.le.s32.totalorder 2, %s18
      // Predicated region
      $region49: #{tpu_custom_call.1} parent=5 // pred_check
        %p350 = pneg %p349
      $region50: #{tpu_custom_call.1} parent=5 // pred_check_branch
        %352 = sbr.rel (%p350) target = $region52
      $region51: #{tpu_custom_call.1} parent=5 // pred_region
        %s353 = ssub.s32 %s18, 2
        // Predicated region
        $region53: #{tpu_custom_call.1} parent=51 // pred_check
          %p354 = pneg %p154
        $region54: #{tpu_custom_call.1} parent=51 // pred_check_branch
          %356 = sbr.rel (%p354) target = $region56
        $region55: #{tpu_custom_call.1} parent=51 // pred_region
          %s357 = sand.u32 %s139, 1
          %s358 = scalar_lea.sflag [#allocation4], %s357
          %s359 = sand.u32 %s139, 1
          %s360 = smul.addr %s359, 8
          %s361 = scalar_lea.vmem [#allocation8], %s360
          %363 = dma.done %s358, 128
        $region56: #{tpu_custom_call.1} parent=51 // pred_fallthru
          _
      $region52: #{tpu_custom_call.1} parent=5 // pred_fallthru
        _
    $region6: #{tpu_custom_call.1} parent=1 // loop_footer
      %s22 = sadd.s32 1, %s18
    $region7: #{tpu_custom_call.1} parent=1 // loop_footer_branch
      %17 = sbr.rel target = $region3
    $region8: #{tpu_custom_call.1} parent=1 // loop_exit
      _
    %364 = vsyncpa [#allocation3], 1
    %s365 = scalar_lea.sflag [#allocation3], 1
    %366 = vsyncpa %s365, 1
    %367 = vsyncpa [#allocation6], 1
    %s368 = scalar_lea.sflag [#allocation6], 1
    %369 = vsyncpa %s368, 1
    %370 = vsyncpa [#allocation4], 1
    %s371 = scalar_lea.sflag [#allocation4], 1
    %372 = vsyncpa %s371, 1

</llo_original>
